<compile_context>
chip_gen: v5e
topology: v5e:2x2
jax: 0.10.0
libtpu: 0.0.40
codegen_flags: <defaults>
</compile_context>

<pallas_src>
import jax
import jax.numpy as jnp
from jax.experimental import pallas as pl
from jax.experimental.pallas import tpu as pltpu

NUM_GRAPH_MODELS = 3
BN_EPS = 1e-5


# ---------------------------------------------------------------------------
# Stage 1: degree reduction    deg[b, n] = sum_m adj[b, n, m]
# ---------------------------------------------------------------------------
def _deg_kernel(adj_ref, deg_ref):
    # Column axis (program_id(2)) is the reduction axis: the deg block stays
    # resident in VMEM across it (same output block index), classic P3 pattern.
    @pl.when(pl.program_id(2) == 0)
    def _():
        deg_ref[...] = jnp.zeros_like(deg_ref)

    deg_ref[...] += jnp.sum(adj_ref[...].astype(jnp.float32), axis=-1)


def _choose_tile(dim, preferred, align):
    """Largest multiple of `align` that divides `dim`, capped at `preferred`.
    Falls back to the full extent (a full-extent block is always legal)."""
    if dim <= preferred:
        return dim
    t = (preferred // align) * align
    while t >= align:
        if dim % t == 0:
            return t
        t -= align
    return dim


# ---------------------------------------------------------------------------
# Stage 2: pooled stats -> encoder -> BatchNorm -> ReLU -> mean over models
#          -> predictor.  BatchNorm uses batch statistics over the full B,
#          so the batch axis is deliberately NOT tiled here.
# ---------------------------------------------------------------------------
def _encode_kernel(deg_ref,
                   w_rel_ref, b_rel_ref, w_root_ref,
                   w_enc_ref, b_enc_ref, bn_gamma_ref, bn_beta_ref,
                   w_pred_ref, b_pred_ref,
                   y_ref, rep_ref):
    B, N = deg_ref.shape
    H = w_rel_ref.shape[-1]

    deg = deg_ref[...]                                   # (B, N) lane-dense
    sum_deg = jnp.sum(deg, axis=1, keepdims=True)        # (B, 1)
    max_deg = jnp.max(deg, axis=1, keepdims=True)        # (B, 1)
    min_deg = jnp.min(deg, axis=1, keepdims=True)        # (B, 1)

    # encoder Linear(2H -> H): split the weight so cat([sum_pool, max_pool])
    # never has to be materialised (cat-then-matmul == split-matmuls-then-add).
    w_enc_sum = w_enc_ref[0:H, :]                        # (H, H)
    w_enc_max = w_enc_ref[H:2 * H, :]                    # (H, H)
    b_enc = b_enc_ref[...]                               # (1, H)
    gamma = bn_gamma_ref[...]                            # (1, H)
    beta = bn_beta_ref[...]                              # (1, H)

    # rep[b,n,h] = deg[b,n] * wrel_sum[h] + const[h]  (x == ones).  Pooling
    # collapses algebraically, so the (B,N,H) intermediate is never built:
    #   sum_n rep = sum_deg * wrel_sum + N * const
    #   max_n rep = const + max(max_deg * wrel_sum, min_deg * wrel_sum)
    # (sign-aware form, exact for any sign of wrel_sum).
    ps_list, pm_list = [], []
    for i in range(NUM_GRAPH_MODELS):                    # static unroll, 3 models
        wrel_sum = jnp.sum(w_rel_ref[i], axis=0, keepdims=True)               # (1, H)
        const = b_rel_ref[i] + jnp.sum(w_root_ref[i], axis=0, keepdims=True)  # (1, H)
        ps_list.append(sum_deg * wrel_sum + float(N) * const)                 # (B, H)
        pm_list.append(const + jnp.maximum(max_deg * wrel_sum,
                                           min_deg * wrel_sum))               # (B, H)

    # Fuse the 6 tiny encoder matmuls into 2 MXU pushes with M = 3B, K = H.
    ps_all = jnp.concatenate(ps_list, axis=0)            # (3B, H)
    pm_all = jnp.concatenate(pm_list, axis=0)            # (3B, H)
    enc_all = (jnp.dot(ps_all, w_enc_sum, preferred_element_type=jnp.float32)
               + jnp.dot(pm_all, w_enc_max, preferred_element_type=jnp.float32)
               + b_enc)                                  # (3B, H)

    # BatchNorm1d in training mode (fresh nn.Module): per-model batch stats
    # over the B rows, biased variance.  gamma=1, beta=0 at init.
    acc = jnp.zeros((B, H), jnp.float32)
    for i in range(NUM_GRAPH_MODELS):
        enc = enc_all[i * B:(i + 1) * B, :]              # (B, H)
        mean = jnp.mean(enc, axis=0, keepdims=True)
        var = jnp.mean((enc - mean) ** 2, axis=0, keepdims=True)
        bn = (enc - mean) * jax.lax.rsqrt(var + BN_EPS) * gamma + beta
        acc = acc + jnp.maximum(bn, 0.0)                 # ReLU, accumulated

    rep_graph = acc * (1.0 / NUM_GRAPH_MODELS)           # mean over the 3 models
    rep_ref[...] = rep_graph
    y_ref[...] = (jnp.dot(rep_graph, w_pred_ref[...],
                          preferred_element_type=jnp.float32)
                  + b_pred_ref[...])


# ---------------------------------------------------------------------------
# Wrapper
# ---------------------------------------------------------------------------
def graph_pred_model(x, adj, params, *, cast_adj_to_bf16=True):
    # dataset == 'synthetic' -> x = ones_like(x): x is never read (only its
    # shape, which is implied by adj / params), so it is not DMA'd at all.
    del x
    B, N, _ = adj.shape
    H = params['w_rel'].shape[-1]
    n_out = params['w_pred'].shape[-1]

    # bf16 DMA is exact for 0/1 adjacency entries; accumulation stays in f32.
    adj_in = adj.astype(jnp.bfloat16) if cast_adj_to_bf16 else adj
    adj_item = jnp.dtype(adj_in.dtype).itemsize

    # --- Stage 1: tiled, pipelined degree reduction over adj ---------------
    # Tile constraints: adj block (TB, TR, TC) needs TR % 8 == 0 (sublane) and
    # TC % 128 == 0 (lane) or full extent; deg block (TB, TR) needs TB % 8 == 0
    # and TR % 128 == 0 or full extent.  TR therefore aligns to 128.
    TB = _choose_tile(B, 8, 8)
    TR = _choose_tile(N, 256, 128)
    TC = _choose_tile(N, 2048, 128)      # reduced-axis tile kept large (>= 512)

    adj_block_bytes = TB * TR * TC * adj_item
    deg_block_bytes = TB * TR * 4
    vmem_needed = 2 * (adj_block_bytes + deg_block_bytes)   # double-buffered
    vmem_limit = int(min(48 << 20, max(32 << 20, vmem_needed + (8 << 20))))

    deg = pl.pallas_call(
        _deg_kernel,
        out_shape=jax.ShapeDtypeStruct((B, N), jnp.float32),
        grid=(pl.cdiv(B, TB), pl.cdiv(N, TR), pl.cdiv(N, TC)),
        in_specs=[pl.BlockSpec((TB, TR, TC), lambda b, r, c: (b, r, c))],
        out_specs=pl.BlockSpec((TB, TR), lambda b, r, c: (b, r)),
        compiler_params=pltpu.CompilerParams(
            dimension_semantics=("parallel", "parallel", "arbitrary"),
            vmem_limit_bytes=vmem_limit),
        cost_estimate=pl.CostEstimate(
            flops=2 * B * N * N,
            transcendentals=0,
            bytes_accessed=int(adj_in.size) * adj_item + B * N * 4),
    )(adj_in)

    # --- Stage 2: tiny encoder / BN / predictor pass ------------------------
    vmem = pl.BlockSpec(memory_space=pltpu.MemorySpace.VMEM)
    inputs = (deg,
              params['w_rel'], params['b_rel'], params['w_root'],
              params['w_enc'], params['b_enc'],
              params['bn_gamma'], params['bn_beta'],
              params['w_pred'], params['b_pred'])

    bytes_accessed = (sum(int(a.size) * jnp.dtype(a.dtype).itemsize for a in inputs)
                      + (B * n_out + B * H) * 4)
    flops = (6 * B * N                                   # deg sum/max/min
             + 8 * NUM_GRAPH_MODELS * B * H              # pooled build
             + 4 * NUM_GRAPH_MODELS * B * H * H          # encoder matmuls
             + 12 * NUM_GRAPH_MODELS * B * H             # batch-norm + relu
             + 2 * B * H * n_out)                        # predictor
    cost = pl.CostEstimate(flops=int(flops),
                           transcendentals=NUM_GRAPH_MODELS * H,
                           bytes_accessed=int(bytes_accessed))

    y_pred, rep_graph = pl.pallas_call(
        _encode_kernel,
        out_shape=(jax.ShapeDtypeStruct((B, n_out), jnp.float32),
                   jax.ShapeDtypeStruct((B, H), jnp.float32)),
        in_specs=[vmem] * len(inputs),
        out_specs=(vmem, vmem),
        cost_estimate=cost,
    )(*inputs)
    return {'y_pred': y_pred, 'rep_graph': rep_graph}


# ---------------------------------------------------------------------------
# Parameter init (matches PyTorch default Linear init ranges)
# ---------------------------------------------------------------------------
def init_params(key, x_dim, h_dim, n_out):
    ks = jax.random.split(key, 7)

    def lin(k, fan_in, shape):
        bound = 1.0 / jnp.sqrt(jnp.float32(fan_in))
        return jax.random.uniform(k, shape, jnp.float32, -bound, bound)

    # NOTE: the module's `mask` Parameter is never used in forward (mask=None),
    # so it is intentionally omitted here.
    return dict(
        w_rel=lin(ks[0], x_dim, (NUM_GRAPH_MODELS, x_dim, h_dim)),
        b_rel=lin(ks[1], x_dim, (NUM_GRAPH_MODELS, 1, h_dim)),
        w_root=lin(ks[2], x_dim, (NUM_GRAPH_MODELS, x_dim, h_dim)),
        w_enc=lin(ks[3], 2 * h_dim, (2 * h_dim, h_dim)),
        b_enc=lin(ks[4], 2 * h_dim, (1, h_dim)),
        bn_gamma=jnp.ones((1, h_dim), jnp.float32),
        bn_beta=jnp.zeros((1, h_dim), jnp.float32),
        w_pred=lin(ks[5], h_dim, (h_dim, n_out)),
        b_pred=lin(ks[6], h_dim, (1, n_out)),
    )


def reference_forward(x, adj, params):
    """Plain-JAX reference matching the PyTorch forward (for verification)."""
    x = jnp.ones_like(x)
    reps = []
    for i in range(NUM_GRAPH_MODELS):
        agg = jnp.einsum('bnm,bmd->bnd', adj, x)
        rep = (agg @ params['w_rel'][i] + params['b_rel'][i][None]
               + x @ params['w_root'][i])
        graph_rep = jnp.concatenate(
            [jnp.sum(rep, axis=1), jnp.max(rep, axis=1)], axis=-1)
        enc = graph_rep @ params['w_enc'] + params['b_enc']
        mean = jnp.mean(enc, axis=0, keepdims=True)
        var = jnp.mean((enc - mean) ** 2, axis=0, keepdims=True)
        bn = (enc - mean) / jnp.sqrt(var + BN_EPS)
        bn = bn * params['bn_gamma'] + params['bn_beta']
        reps.append(jnp.maximum(bn, 0.0))
    rep_graph = jnp.mean(jnp.stack(reps, axis=0), axis=0)
    y_pred = rep_graph @ params['w_pred'] + params['b_pred']
    return {'y_pred': y_pred, 'rep_graph': rep_graph}


if __name__ == "__main__":
    B, N, X_DIM, H_DIM, N_OUT = 2, 16, 4, 32, 2   # N == max_num_nodes

    key = jax.random.PRNGKey(0)
    k_x, k_adj, k_params = jax.random.split(key, 3)

    x = jax.random.normal(k_x, (B, N, X_DIM), jnp.float32)
    adj_rand = jax.random.uniform(k_adj, (B, N, N), jnp.float32)
    adj = (adj_rand < 0.3).astype(jnp.float32)
    adj = jnp.maximum(adj, jnp.swapaxes(adj, -1, -2))   # symmetric 0/1 adjacency

    params = init_params(k_params, X_DIM, H_DIM, N_OUT)

    out = graph_pred_model(x, adj, params)
    jax.block_until_ready(out)

    ref = reference_forward(x, adj, params)
    assert jnp.allclose(out['y_pred'], ref['y_pred'], rtol=1e-3, atol=1e-3)
    assert jnp.allclose(out['rep_graph'], ref['rep_graph'], rtol=1e-3, atol=1e-3)

    print("KERNEL_OK")
</pallas_src>

<mosaic_0001>
module attributes {stable_mosaic.version = 11 : i64} {
  func.func @_deg_kernel(%arg0: i32, %arg1: i32, %arg2: i32, %arg3: memref<2x16x16xbf16, #tpu.memory_space<vmem>>, %arg4: memref<2x16xf32, #tpu.memory_space<vmem>>) attributes {dimension_semantics = [#tpu.dimension_semantics<parallel>, #tpu.dimension_semantics<parallel>, #tpu.dimension_semantics<arbitrary>], iteration_bounds = array<i64: 1, 1, 1>, scalar_prefetch = 0 : i64, scratch_operands = 0 : i64, tpu.core_type = #tpu.core_type<tc>, window_params = [{transform_indices = @transform_0, window_bounds = array<i64: 2, 16, 16>}, {transform_indices = @transform_1, window_bounds = array<i64: 2, 16>}]} {
    %c0_i32 = arith.constant 0 : i32
    %0 = arith.cmpi eq, %arg2, %c0_i32 : i32
    %1 = arith.extui %0 : i1 to i32
    %c0_i32_0 = arith.constant 0 : i32
    %2 = arith.cmpi ne, %1, %c0_i32_0 : i32
    scf.if %2 {
      %cst_7 = arith.constant 0.000000e+00 : f32
      %9 = vector.broadcast %cst_7 : f32 to vector<2x16xf32>
      %c0_8 = arith.constant 0 : index
      %c0_9 = arith.constant 0 : index
      %10 = vector.load %arg4[%c0_8, %c0_9] : memref<2x16xf32, #tpu.memory_space<vmem>>, vector<2x16xf32>
      tpu.vector_store %arg4[%c0_8, %c0_9], %9 {strides = array<i32>} : memref<2x16xf32, #tpu.memory_space<vmem>>, vector<2x16xf32>,
    } else {
    }
    %c0 = arith.constant 0 : index
    %c0_1 = arith.constant 0 : index
    %3 = vector.load %arg4[%c0, %c0_1] : memref<2x16xf32, #tpu.memory_space<vmem>>, vector<2x16xf32>
    %c0_2 = arith.constant 0 : index
    %c0_3 = arith.constant 0 : index
    %c0_4 = arith.constant 0 : index
    %4 = vector.load %arg3[%c0_2, %c0_3, %c0_4] : memref<2x16x16xbf16, #tpu.memory_space<vmem>>, vector<2x16x16xbf16>
    %5 = arith.extf %4 : vector<2x16x16xbf16> to vector<2x16x16xf32>
    %cst = arith.constant dense<0.000000e+00> : vector<2x16xf32>
    %6 = vector.multi_reduction <add>, %5, %cst [2] : vector<2x16x16xf32> to vector<2x16xf32>
    %7 = arith.addf %3, %6 : vector<2x16xf32>
    %c0_5 = arith.constant 0 : index
    %c0_6 = arith.constant 0 : index
    %8 = vector.load %arg4[%c0_5, %c0_6] : memref<2x16xf32, #tpu.memory_space<vmem>>, vector<2x16xf32>
    tpu.vector_store %arg4[%c0_5, %c0_6], %7 {strides = array<i32>} : memref<2x16xf32, #tpu.memory_space<vmem>>, vector<2x16xf32>,
    return
  }
  func.func @transform_0(%arg0: i32, %arg1: i32, %arg2: i32) -> (i32, i32, i32) {
    %c0_i32 = arith.constant 0 : i32
    return %arg0, %arg1, %arg2 : i32, i32, i32
  }
  func.func @transform_1(%arg0: i32, %arg1: i32, %arg2: i32) -> (i32, i32) {
    %c0_i32 = arith.constant 0 : i32
    return %arg0, %arg1 : i32, i32
  }
}

</mosaic_0001>

<llo_original>
// kernel: tpu_custom_call.1
$region0: #{tpu_custom_call.1}
  #allocation0 [shape = 'u32[]', space=smem, size = 0x4, offset = 0x4, fixed_abs, tag = 'smem constant byte address 0x4 - core index']
  #allocation1 [shape = 'u32[72,128]{1,0:T(1,128)}', space=vmem, size = 0x9000, scoped, tag = 'internal scratch']
  %s0 = inlined_call_operand.hbm [shape: bf16[2,16,16], index: 0, kind: input, shape index: {}]
  %s1 = inlined_call_operand.hbm [shape: f32[2,16], index: 1, kind: output, shape index: {}]
  %s2 = sld [smem:[#allocation0]]
  $region22: #{tpu_custom_call.1} parent=0
    _
  %s4 = ssub.s32 1, %s2
  %s5 = scalar_select 0, %s4, %s2
  $region1: #{tpu_custom_call.1} parent=0
    #allocation2 [shape = 'u8[8192]{0}', space=vmem, size = 0x2000, scoped, tag = 'input window, operand 0, single buffered']
    #allocation3 [shape = 's32[1]{0}', space=sflag, size = 0x4, scoped, tag = 'scoped memory for tpu_custom_call.1']
    #allocation4 [shape = 's32[1]{0}', space=sflag, size = 0x4, scoped, tag = 'scoped memory for tpu_custom_call.1']
    #allocation5 [shape = 'u8[1024]{0}', space=vmem, size = 0x400, scoped, tag = 'output window, operand 0, single buffered']
    %6 = vsyncpa [#allocation3], 0
    %7 = vsyncpa [#allocation4], 0
    // Predicated region
    $region2: #{tpu_custom_call.1} parent=1 // pred_check
      _
    $region3: #{tpu_custom_call.1} parent=1 // pred_check_branch
      %9 = sbr.rel (0) target = $region5
    $region4: #{tpu_custom_call.1} parent=1 // pred_region
      %11 = vsyncadd [#allocation3], 0
      %s12 = sshll.u32 %s0, 4
      %s13 = int_to_ptr.hbm [resolvable:$true] %s12
      %s14 = sshll.u32 [#allocation2], 4
      %s15 = int_to_ptr.vmem [resolvable:$true] %s14
      %20 = dma.hbm_to_vmem [thread:$0]  %s13, 256, %s15, [#allocation3], 64, 64, 4
    $region5: #{tpu_custom_call.1} parent=1 // pred_fallthru
      _
    // Predicated region
    $region6: #{tpu_custom_call.1} parent=1 // pred_check
      _
    $region7: #{tpu_custom_call.1} parent=1 // pred_check_branch
      %22 = sbr.rel (0) target = $region9
    $region8: #{tpu_custom_call.1} parent=1 // pred_region
      %24 = dma.done [#allocation3], 256
    $region9: #{tpu_custom_call.1} parent=1 // pred_fallthru
      _
    %p25 = scmp.eq.s32.totalorder 0, 0
    // Predicated region
    $region10: #{tpu_custom_call.1} parent=1 // pred_check
      %p26 = pneg %p25
    $region11: #{tpu_custom_call.1} parent=1 // pred_check_branch
      %28 = sbr.rel (%p26) target = $region13
    $region12: #{tpu_custom_call.1} parent=1 // pred_region
      %vm29 = vcmask 123904
      %30 = vst.msk [vmem:[#allocation5] sm:$0x3] %vm29, 0.0
    $region13: #{tpu_custom_call.1} parent=1 // pred_fallthru
      _
    %v31 = vld [vmem:[#allocation5] sm:$0x3]
    %v32 = vld [vmem:[#allocation2] sm:$0xf]
    %v33 = vld [vmem:[#allocation2 + $0x4] sm:$0xf]
    %v34 = vld [vmem:[#allocation2 + $0x8] sm:$0xf]
    %v35 = vld [vmem:[#allocation2 + $0xc] sm:$0xf]
    %v36 = vunpack.c.l.bf16 %v32
    %v37 = vunpack.c.l.bf16 %v33
    %v38 = vunpack.c.l.bf16 %v34
    %v39 = vunpack.c.l.bf16 %v35
    %vm40 = vcmask 130048
    %v41 = vsel %vm40, %v36, 0.0
    %42 = vadd.xlane.f32.xlu0 %v41
    %v43 = vpop.xlane.xlu0 %42
    %v44 = vsel %vm40, %v37, 0.0
    %45 = vadd.xlane.f32.xlu0 %v44
    %v46 = vpop.xlane.xlu0 %45
    %v47 = vsel %vm40, %v38, 0.0
    %48 = vadd.xlane.f32.xlu0 %v47
    %v49 = vpop.xlane.xlu0 %48
    %v50 = vsel %vm40, %v39, 0.0
    %51 = vadd.xlane.f32.xlu0 %v50
    %v52 = vpop.xlane.xlu0 %51
    %v57 = vlaneseq
    %v58 = vand.u32 %v57, 127
    %v59 = vperm.slane %v43, %v58
    %v60 = vadd.s32 %v58, 4294967288
    %v61 = vperm.slane %v46, %v60
    %vm62 = vcmask 130112
    %v63 = vsel %vm62, %v61, %v59
    %v64 = vperm.slane %v49, %v58
    %v65 = vperm.slane %v52, %v60
    %v66 = vsel %vm62, %v65, %v64
    %vm67 = vcmask 1041409
    %v68 = vsel %vm67, %v66, %v63
    %v70 = vadd.f32 %v31, %v68
    %vm71 = vcmask 123904
    %72 = vst.msk [vmem:[#allocation5] sm:$0x3] %vm71, %v70
    // Predicated region
    $region14: #{tpu_custom_call.1} parent=1 // pred_check
      _
    $region15: #{tpu_custom_call.1} parent=1 // pred_check_branch
      %74 = sbr.rel (0) target = $region17
    $region16: #{tpu_custom_call.1} parent=1 // pred_region
      %76 = vsyncadd [#allocation4], 0
      %s78 = sshll.u32 [#allocation5], 4
      %s79 = int_to_ptr.vmem [resolvable:$true] %s78
      %s80 = sshll.u32 %s1, 4
      %s81 = int_to_ptr.hbm [resolvable:$true] %s80
      %83 = dma.vmem_to_hbm [thread:$0]  %s79, 32, %s81, [#allocation4]
    $region17: #{tpu_custom_call.1} parent=1 // pred_fallthru
      _
    // Predicated region
    $region18: #{tpu_custom_call.1} parent=1 // pred_check
      _
    $region19: #{tpu_custom_call.1} parent=1 // pred_check_branch
      %85 = sbr.rel (0) target = $region21
    $region20: #{tpu_custom_call.1} parent=1 // pred_region
      %87 = dma.done [#allocation4], 32
    $region21: #{tpu_custom_call.1} parent=1 // pred_fallthru
      _
    %88 = vsyncpa [#allocation3], 1
    %89 = vsyncpa [#allocation4], 1

</llo_original>
